<compile_context>
chip_gen: v5e
topology: v5e:2x2
jax: 0.10.0
libtpu: 0.0.40
codegen_flags: <defaults>
</compile_context>

<pallas_src>
import jax
import jax.numpy as jnp
import numpy as np
from jax.experimental import pallas as pl
from jax.experimental.pallas import tpu as pltpu

EPS = 1e-5
K_OPS = 4  # identity, Laplacian, EW-gradient, NS-gradient


def _round_up(x, m):
    return (x + m - 1) // m * m


def _regroup(feats, c, b, nv):
    """(c*b, 4*nv) rows=(chan,batch), cols=(k,vert) -> (4*c, b*nv) rows=(k,chan), cols=(batch,vert).

    Static 128-lane-aligned slices + row-major reshapes + a sublane concat
    (each 128-lane chunk stays intact, no intra-vreg lane shuffles).
    """
    parts = [feats[:, k * nv:(k + 1) * nv].reshape(c, b * nv) for k in range(K_OPS)]
    return jnp.concatenate(parts, axis=0)


def _scale_shift(s1, s2, gamma, beta, inv_n):
    """Training-mode BN affine from accumulated sum / sum-of-squares (f32)."""
    mean = s1 * inv_n
    var = s2 * inv_n - mean * mean     # fine at these magnitudes (see review note)
    sc = gamma * jax.lax.rsqrt(var + EPS)   # rsqrt -> EUP slot
    return sc, beta - mean * sc


# --------------------------- kernel A: up + cross ---------------------------
def _make_up_cross_kernel(cout, b, nv_valid, tnv, nblk):
    inv_n = 1.0 / float(b * nv_valid)   # padded vertices contribute 0 to the sums

    def kernel(x1_ref, x2_ref, dupT_ref, cup_ref, convw_ref, bn_ref,
               x_ref, up_scr, cr_scr, st_ref):
        # x1_ref:   (Cout*B, NVP_pad)   bf16, coarse input, rows (chan, batch)
        # x2_ref:   (1, Cin, B*TNV)     f32, fine skip input tile
        # dupT_ref: (1, NVP_pad, 4*TNV) bf16, up-conv operator tile (cols = (k, vert))
        # cup_ref:  (Cout, 4*Cout)      f32 mesh-conv coeffs, cols = (k, in_chan)
        # convw_ref:(Cout, Cin)         f32 1x1 conv weight
        # bn_ref:   (Cout, 4)           g_up, be_up, g_cr, be_cr
        # x_ref:    (NBLK, Cout, B*TNV) bf16 output: x = relu(bn(up)) + relu(bn(cr))
        j = pl.program_id(0)

        @pl.when(j == 0)
        def _():
            st_ref[...] = jnp.zeros_like(st_ref)

        # up branch: all 4 mesh operators in ONE bf16 MXU dot, f32 accumulate,
        # then ONE coeff dot on the regrouped features (f32).
        feats = jnp.dot(x1_ref[...], dupT_ref[0],
                        preferred_element_type=jnp.float32)          # (Cout*B, 4*TNV)
        up = jnp.dot(cup_ref[...], _regroup(feats, cout, b, tnv),
                     preferred_element_type=jnp.float32)             # (Cout, B*TNV)

        # cross branch: 1x1 Conv1d (bias cancelled by training-mode BN)
        cr = jnp.dot(convw_ref[...], x2_ref[0],
                     preferred_element_type=jnp.float32)             # (Cout, B*TNV)

        up_scr[j] = up
        cr_scr[j] = cr
        st_ref[...] += jnp.concatenate(
            [jnp.sum(up, axis=1, keepdims=True),
             jnp.sum(up * up, axis=1, keepdims=True),
             jnp.sum(cr, axis=1, keepdims=True),
             jnp.sum(cr * cr, axis=1, keepdims=True)], axis=1)

        @pl.when(j == nblk - 1)
        def _():
            p = bn_ref[...]
            st = st_ref[...]
            sc_u, sh_u = _scale_shift(st[:, 0:1], st[:, 1:2], p[:, 0:1], p[:, 1:2], inv_n)
            sc_c, sh_c = _scale_shift(st[:, 2:3], st[:, 3:4], p[:, 2:3], p[:, 3:4], inv_n)
            xu = jnp.maximum(up_scr[...] * sc_u[None] + sh_u[None], 0.0)
            xc = jnp.maximum(cr_scr[...] * sc_c[None] + sh_c[None], 0.0)
            x_ref[...] = (xu + xc).astype(x_ref.dtype)

    return kernel


# ------------------------------ kernel B: out conv --------------------------
def _make_out_kernel(cout, b, nv_valid, tnv, nblk):
    inv_n = 1.0 / float(b * nv_valid)

    def kernel(x_ref, doutT_ref, cout_ref, bn_ref, o_ref, st_ref):
        # x_ref:     (Cout*B, NV_pad)    bf16, x = up + cr, rows (chan, batch)
        # doutT_ref: (1, NV_pad, 4*TNV)  bf16, out-conv operator tile
        # cout_ref:  (Cout, 4*Cout)      f32 coeffs
        # bn_ref:    (Cout, 2)           g_ot, be_ot
        # o_ref:     (NBLK, Cout, B*TNV) f32 output (pre-BN per tile, BN'd at last)
        j = pl.program_id(0)

        @pl.when(j == 0)
        def _():
            st_ref[...] = jnp.zeros_like(st_ref)

        feats = jnp.dot(x_ref[...], doutT_ref[0],
                        preferred_element_type=jnp.float32)          # (Cout*B, 4*TNV)
        out = jnp.dot(cout_ref[...], _regroup(feats, cout, b, tnv),
                      preferred_element_type=jnp.float32)            # (Cout, B*TNV)

        o_ref[j] = out
        st_ref[...] += jnp.concatenate(
            [jnp.sum(out, axis=1, keepdims=True),
             jnp.sum(out * out, axis=1, keepdims=True)], axis=1)

        @pl.when(j == nblk - 1)
        def _():
            p = bn_ref[...]
            st = st_ref[...]
            sc, sh = _scale_shift(st[:, 0:1], st[:, 1:2], p[:, 0:1], p[:, 1:2], inv_n)
            o_ref[...] = jnp.maximum(o_ref[...] * sc[None] + sh[None], 0.0)

    return kernel


# ------------------------------ wrapper / packing ----------------------------
def _pack_operator(D, n_in_pad, tnv):
    """(K, NVout, NVin) -> (NBLK, n_in_pad, K*tnv) bf16, zero-padded."""
    k, nvo, nvi = D.shape
    nvo_pad = _round_up(nvo, tnv)
    Dp = jnp.zeros((k, nvo_pad, n_in_pad), D.dtype).at[:, :nvo, :nvi].set(D)
    nblk = nvo_pad // tnv
    Dp = Dp.reshape(k, nblk, tnv, n_in_pad).transpose(1, 3, 0, 2)
    return Dp.reshape(nblk, n_in_pad, k * tnv).astype(jnp.bfloat16)


def _pack_x2(x2, nv_pad, tnv):
    """(B, Cin, NV) -> (NBLK, Cin, B*tnv) f32, lane order (batch, vert)."""
    b, cin, nv = x2.shape
    xp = jnp.zeros((b, cin, nv_pad), x2.dtype).at[:, :, :nv].set(x2)
    nblk = nv_pad // tnv
    xp = xp.transpose(1, 0, 2).reshape(cin, b, nblk, tnv).transpose(2, 0, 1, 3)
    return xp.reshape(nblk, cin, b * tnv)


def up_apply(x1, x2, d_up, d_out, cup, ccout, convw, bn_params, *, tile_nv=128):
    """Up-block forward.

    x1: (B, Cout, NVP) coarse input (PyTorch NCL); x2: (B, Cin, NV) fine skip.
    d_up: (4, NV, NVP); d_out: (4, NV, NV); cup/ccout: (Cout, Cout, 4);
    convw: (Cout, Cin); bn_params = (g_up, be_up, g_cr, be_cr, g_ot, be_ot).
    Returns (B, Cout, NV).
    tile_nv: output-vertex tile (multiple of 128); sweep larger (256-1024) on
             v6e/v5e where the raised VMEM budget allows, smaller on v7x.
    """
    assert tile_nv % 128 == 0
    B, Cout, NVP = x1.shape
    Cin, NV = x2.shape[1], x2.shape[2]
    g_up, be_up, g_cr, be_cr, g_ot, be_ot = bn_params

    nvp_pad = _round_up(NVP, 128)
    nv_pad = _round_up(NV, tile_nv)
    nblk = nv_pad // tile_nv

    # ---- layout plumbing stays in the wrapper (XLA fuses with the transposes) ----
    x1k = jnp.transpose(x1, (1, 0, 2)).reshape(Cout * B, NVP)
    x1k = jnp.zeros((Cout * B, nvp_pad), x1.dtype).at[:, :NVP].set(x1k).astype(jnp.bfloat16)
    x2p = _pack_x2(x2, nv_pad, tile_nv)                        # f32 (VPU path stays f32)
    dupT_p = _pack_operator(d_up, nvp_pad, tile_nv)            # bf16 operator stream
    doutT_p = _pack_operator(d_out, nv_pad, tile_nv)           # bf16 operator stream
    cup_cat = jnp.transpose(cup, (0, 2, 1)).reshape(Cout, K_OPS * Cout)
    cout_cat = jnp.transpose(ccout, (0, 2, 1)).reshape(Cout, K_OPS * Cout)
    bnA = jnp.stack([g_up, be_up, g_cr, be_cr], axis=1)        # (Cout, 4)
    bnB = jnp.stack([g_ot, be_ot], axis=1)                     # (Cout, 2)

    cp = pltpu.CompilerParams(
        dimension_semantics=("arbitrary",),        # BN stats couple the vertex tiles
        vmem_limit_bytes=48 * 1024 * 1024,
    )

    # ---- call 1: up branch + cross branch, x = relu(bn(up)) + relu(bn(cr)) ----
    kern_a = _make_up_cross_kernel(Cout, B, NV, tile_nv, nblk)
    x_pre = pl.pallas_call(
        kern_a,
        grid=(nblk,),
        out_shape=jax.ShapeDtypeStruct((nblk, Cout, B * tile_nv), jnp.bfloat16),
        in_specs=[
            pl.BlockSpec((Cout * B, nvp_pad), lambda j: (0, 0)),
            pl.BlockSpec((1, Cin, B * tile_nv), lambda j: (j, 0, 0)),
            pl.BlockSpec((1, nvp_pad, K_OPS * tile_nv), lambda j: (j, 0, 0)),
            pl.BlockSpec((Cout, K_OPS * Cout), lambda j: (0, 0)),
            pl.BlockSpec((Cout, Cin), lambda j: (0, 0)),
            pl.BlockSpec((Cout, 4), lambda j: (0, 0)),
        ],
        out_specs=pl.BlockSpec((nblk, Cout, B * tile_nv), lambda j: (0, 0, 0)),
        scratch_shapes=[
            pltpu.VMEM((nblk, Cout, B * tile_nv), jnp.float32),   # up pre-BN (resident)
            pltpu.VMEM((nblk, Cout, B * tile_nv), jnp.float32),   # cr pre-BN (resident)
            pltpu.VMEM((Cout, 4), jnp.float32),                   # BN sum / sumsq
        ],
        compiler_params=cp,
    )(x1k, x2p, dupT_p, cup_cat, convw, bnA)

    # tiny bf16 relayout between the two calls: (NBLK, Cout, B, TNV) -> (Cout*B, NV_pad)
    xk = (x_pre.reshape(nblk, Cout, B, tile_nv)
               .transpose(1, 2, 0, 3)
               .reshape(Cout * B, nv_pad))

    # ---- call 2: out_conv MeshConv + BN + ReLU ----
    kern_b = _make_out_kernel(Cout, B, NV, tile_nv, nblk)
    out_pre = pl.pallas_call(
        kern_b,
        grid=(nblk,),
        out_shape=jax.ShapeDtypeStruct((nblk, Cout, B * tile_nv), jnp.float32),
        in_specs=[
            pl.BlockSpec((Cout * B, nv_pad), lambda j: (0, 0)),
            pl.BlockSpec((1, nv_pad, K_OPS * tile_nv), lambda j: (j, 0, 0)),
            pl.BlockSpec((Cout, K_OPS * Cout), lambda j: (0, 0)),
            pl.BlockSpec((Cout, 2), lambda j: (0, 0)),
        ],
        out_specs=pl.BlockSpec((nblk, Cout, B * tile_nv), lambda j: (0, 0, 0)),
        scratch_shapes=[pltpu.VMEM((Cout, 2), jnp.float32)],
        compiler_params=cp,
    )(xk, doutT_p, cout_cat, bnB)

    out = (out_pre.reshape(nblk, Cout, B, tile_nv)
                  .transpose(2, 1, 0, 3)
                  .reshape(B, Cout, nv_pad))
    return out[:, :, :NV]


# ----------------------------- pure-JAX reference -----------------------------
def _mesh_conv_ref(x, D, coeffs, bias):
    feat = jnp.einsum('knm,bim->bink', D, x)
    return jnp.einsum('bink,oik->bon', feat, coeffs) + bias[None, :, None]


def _bn_relu_ref(x, g, b):
    mean = x.mean(axis=(0, 2), keepdims=True)
    var = ((x - mean) ** 2).mean(axis=(0, 2), keepdims=True)
    y = (x - mean) / jnp.sqrt(var + EPS) * g[None, :, None] + b[None, :, None]
    return jnp.maximum(y, 0.0)


if __name__ == "__main__":
    # small shapes consistent with the module: in_ch=16, out_ch=8,
    # fine mesh NV=128 vertices / NF=256 faces, coarse mesh NVP=32 vertices.
    B, IN_CH, OUT_CH = 2, 16, 8
    NV, NVP, NF = 128, 32, 256

    key = jax.random.PRNGKey(0)
    (kG, kL, kF2V, kEW, kNS, kcu, kbu, kcw, kcb,
     kco, kbo, kbn, kx1, kx2) = jax.random.split(key, 14)

    # synthetic mesh operators (stand-ins for pkl['G'], ['L'], ['F2V'], ['EW'], ['NS'])
    G = jax.random.normal(kG, (3, NF, NV), jnp.float32) * 0.2
    L = jax.random.normal(kL, (NV, NV), jnp.float32) * 0.1
    F2V = jax.random.normal(kF2V, (NV, NF), jnp.float32) * 0.1
    EW = jax.random.normal(kEW, (NF, 3), jnp.float32)
    NS = jax.random.normal(kNS, (NF, 3), jnp.float32)

    GEW = jnp.einsum('dfv,fd->fv', G, EW)
    GNS = jnp.einsum('dfv,fd->fv', G, NS)
    Dew = F2V @ GEW
    Dns = F2V @ GNS
    D_full = jnp.stack([jnp.eye(NV, dtype=jnp.float32), L, Dew, Dns])  # (4, NV, NV)
    D_up = D_full[:, :, :NVP]   # zero-padded coarse input == slice columns

    # deterministic synthetic parameters (matching __init__ shapes)
    cup = jax.random.normal(kcu, (OUT_CH, OUT_CH, 4), jnp.float32) * 0.3
    bup = jax.random.normal(kbu, (OUT_CH,), jnp.float32) * 0.1
    convw = jax.random.normal(kcw, (OUT_CH, IN_CH), jnp.float32) * 0.3
    bconv = jax.random.normal(kcb, (OUT_CH,), jnp.float32) * 0.1
    ccout = jax.random.normal(kco, (OUT_CH, OUT_CH, 4), jnp.float32) * 0.3
    bout = jax.random.normal(kbo, (OUT_CH,), jnp.float32) * 0.1
    bn = jax.random.normal(kbn, (6, OUT_CH), jnp.float32) * 0.1
    g_up, be_up = 1.0 + bn[0], bn[1]
    g_cr, be_cr = 1.0 + bn[2], bn[3]
    g_ot, be_ot = 1.0 + bn[4], bn[5]

    # inputs (PyTorch NCL layout)
    x1 = jax.random.normal(kx1, (B, OUT_CH, NVP), jnp.float32)
    x2 = jax.random.normal(kx2, (B, IN_CH, NV), jnp.float32)

    out = up_apply(x1, x2, D_up, D_full, cup, ccout, convw,
                   (g_up, be_up, g_cr, be_cr, g_ot, be_ot), tile_nv=128)
    out = jax.block_until_ready(out)

    # reference forward (plain JAX, PyTorch semantics, biases included)
    u = _bn_relu_ref(_mesh_conv_ref(x1, D_up, cup, bup), g_up, be_up)
    c = _bn_relu_ref(jnp.einsum('oi,bin->bon', convw, x2) + bconv[None, :, None],
                     g_cr, be_cr)
    ref = _bn_relu_ref(_mesh_conv_ref(u + c, D_full, ccout, bout), g_ot, be_ot)

    err = float(jnp.max(jnp.abs(out - ref)))
    assert out.shape == (B, OUT_CH, NV)
    # bf16 operators/activations with f32 accumulation: expect ~1e-2 abs error
    assert np.isfinite(err) and err < 5e-2, f"max abs err {err}"
    print("KERNEL_OK")
</pallas_src>

<mosaic_0001>
module attributes {stable_mosaic.version = 11 : i64} {
  func.func @kernel(%arg0: i32, %arg1: memref<16x128xbf16, #tpu.memory_space<vmem>>, %arg2: memref<1x16x256xf32, #tpu.memory_space<vmem>>, %arg3: memref<1x128x512xbf16, #tpu.memory_space<vmem>>, %arg4: memref<8x32xf32, #tpu.memory_space<vmem>>, %arg5: memref<8x16xf32, #tpu.memory_space<vmem>>, %arg6: memref<8x4xf32, #tpu.memory_space<vmem>>, %arg7: memref<1x8x256xbf16, #tpu.memory_space<vmem>>, %arg8: memref<1x8x256xf32, #tpu.memory_space<vmem>>, %arg9: memref<1x8x256xf32, #tpu.memory_space<vmem>>, %arg10: memref<8x4xf32, #tpu.memory_space<vmem>>) attributes {dimension_semantics = [#tpu.dimension_semantics<arbitrary>], iteration_bounds = array<i64: 1>, scalar_prefetch = 0 : i64, scratch_operands = 3 : i64, tpu.core_type = #tpu.core_type<tc>, window_params = [{pipeline_mode = #tpu.pipeline_mode<synchronous>, transform_indices = @transform_0, window_bounds = array<i64: 16, 128>}, {transform_indices = @transform_1, window_bounds = array<i64: 1, 16, 256>}, {transform_indices = @transform_2, window_bounds = array<i64: 1, 128, 512>}, {pipeline_mode = #tpu.pipeline_mode<synchronous>, transform_indices = @transform_3, window_bounds = array<i64: 8, 32>}, {pipeline_mode = #tpu.pipeline_mode<synchronous>, transform_indices = @transform_4, window_bounds = array<i64: 8, 16>}, {pipeline_mode = #tpu.pipeline_mode<synchronous>, transform_indices = @transform_5, window_bounds = array<i64: 8, 4>}, {pipeline_mode = #tpu.pipeline_mode<synchronous>, transform_indices = @transform_6, window_bounds = array<i64: 1, 8, 256>}]} {
    %c0_i32 = arith.constant 0 : i32
    %0 = arith.cmpi eq, %arg0, %c0_i32 : i32
    %1 = arith.extui %0 : i1 to i32
    %c0_i32_0 = arith.constant 0 : i32
    %2 = arith.cmpi ne, %1, %c0_i32_0 : i32
    scf.if %2 {
      %cst_28 = arith.constant 0.000000e+00 : f32
      %47 = vector.broadcast %cst_28 : f32 to vector<8x4xf32>
      %c0_29 = arith.constant 0 : index
      %c0_30 = arith.constant 0 : index
      %48 = vector.load %arg10[%c0_29, %c0_30] : memref<8x4xf32, #tpu.memory_space<vmem>>, vector<8x4xf32>
      tpu.vector_store %arg10[%c0_29, %c0_30], %47 {strides = array<i32>} : memref<8x4xf32, #tpu.memory_space<vmem>>, vector<8x4xf32>,
    } else {
    }
    %c0 = arith.constant 0 : index
    %c0_1 = arith.constant 0 : index
    %3 = vector.load %arg1[%c0, %c0_1] : memref<16x128xbf16, #tpu.memory_space<vmem>>, vector<16x128xbf16>
    %c0_2 = arith.constant 0 : index
    %c0_3 = arith.constant 0 : index
    %c0_4 = arith.constant 0 : index
    %4 = vector.load %arg3[%c0_2, %c0_3, %c0_4] : memref<1x128x512xbf16, #tpu.memory_space<vmem>>, vector<1x128x512xbf16>
    %5 = vector.shape_cast %4 : vector<1x128x512xbf16> to vector<128x512xbf16>
    %cst = arith.constant dense<0.000000e+00> : vector<16x512xf32>
    %6 = tpu.matmul %3, %5, %cst {dimension_numbers = #tpu.dot_dimension_numbers<[1], [0], [0], [1], [0, 0, 1, 1], [], []>} : vector<16x128xbf16>, vector<128x512xbf16>, vector<16x512xf32> -> vector<16x512xf32>
    %c0_5 = arith.constant 0 : index
    %c0_6 = arith.constant 0 : index
    %7 = vector.load %arg4[%c0_5, %c0_6] : memref<8x32xf32, #tpu.memory_space<vmem>>, vector<8x32xf32>
    %8 = vector.extract_strided_slice %6 {offsets = [0, 0], sizes = [16, 128], strides = [1, 1]} : vector<16x512xf32> to vector<16x128xf32>
    %9 = vector.shape_cast %8 : vector<16x128xf32> to vector<8x256xf32>
    %10 = vector.extract_strided_slice %6 {offsets = [0, 128], sizes = [16, 128], strides = [1, 1]} : vector<16x512xf32> to vector<16x128xf32>
    %11 = vector.shape_cast %10 : vector<16x128xf32> to vector<8x256xf32>
    %12 = vector.extract_strided_slice %6 {offsets = [0, 256], sizes = [16, 128], strides = [1, 1]} : vector<16x512xf32> to vector<16x128xf32>
    %13 = vector.shape_cast %12 : vector<16x128xf32> to vector<8x256xf32>
    %14 = vector.extract_strided_slice %6 {offsets = [0, 384], sizes = [16, 128], strides = [1, 1]} : vector<16x512xf32> to vector<16x128xf32>
    %15 = vector.shape_cast %14 : vector<16x128xf32> to vector<8x256xf32>
    %16 = tpu.concatenate %9, %11, %13, %15 in 0 : vector<8x256xf32>, vector<8x256xf32>, vector<8x256xf32>, vector<8x256xf32> -> vector<32x256xf32>
    %cst_7 = arith.constant dense<0.000000e+00> : vector<8x256xf32>
    %17 = tpu.matmul %7, %16, %cst_7 {dimension_numbers = #tpu.dot_dimension_numbers<[1], [0], [0], [1], [0, 0, 1, 1], [], []>} : vector<8x32xf32>, vector<32x256xf32>, vector<8x256xf32> -> vector<8x256xf32>
    %c0_8 = arith.constant 0 : index
    %c0_9 = arith.constant 0 : index
    %18 = vector.load %arg5[%c0_8, %c0_9] : memref<8x16xf32, #tpu.memory_space<vmem>>, vector<8x16xf32>
    %c0_10 = arith.constant 0 : index
    %c0_11 = arith.constant 0 : index
    %c0_12 = arith.constant 0 : index
    %19 = vector.load %arg2[%c0_10, %c0_11, %c0_12] : memref<1x16x256xf32, #tpu.memory_space<vmem>>, vector<1x16x256xf32>
    %20 = vector.shape_cast %19 : vector<1x16x256xf32> to vector<16x256xf32>
    %cst_13 = arith.constant dense<0.000000e+00> : vector<8x256xf32>
    %21 = tpu.matmul %18, %20, %cst_13 {dimension_numbers = #tpu.dot_dimension_numbers<[1], [0], [0], [1], [0, 0, 1, 1], [], []>} : vector<8x16xf32>, vector<16x256xf32>, vector<8x256xf32> -> vector<8x256xf32>
    %22 = arith.index_cast %arg0 : i32 to index
    %c0_14 = arith.constant 0 : index
    %c0_15 = arith.constant 0 : index
    %23 = vector.load %arg8[%22, %c0_14, %c0_15] : memref<1x8x256xf32, #tpu.memory_space<vmem>>, vector<1x8x256xf32>
    %24 = vector.shape_cast %23 : vector<1x8x256xf32> to vector<8x256xf32>
    %25 = vector.shape_cast %17 : vector<8x256xf32> to vector<1x8x256xf32>
    tpu.vector_store %arg8[%22, %c0_14, %c0_15], %25 {strides = array<i32>} : memref<1x8x256xf32, #tpu.memory_space<vmem>>, vector<1x8x256xf32>,
    %26 = arith.index_cast %arg0 : i32 to index
    %c0_16 = arith.constant 0 : index
    %c0_17 = arith.constant 0 : index
    %27 = vector.load %arg9[%26, %c0_16, %c0_17] : memref<1x8x256xf32, #tpu.memory_space<vmem>>, vector<1x8x256xf32>
    %28 = vector.shape_cast %27 : vector<1x8x256xf32> to vector<8x256xf32>
    %29 = vector.shape_cast %21 : vector<8x256xf32> to vector<1x8x256xf32>
    tpu.vector_store %arg9[%26, %c0_16, %c0_17], %29 {strides = array<i32>} : memref<1x8x256xf32, #tpu.memory_space<vmem>>, vector<1x8x256xf32>,
    %c0_18 = arith.constant 0 : index
    %c0_19 = arith.constant 0 : index
    %30 = vector.load %arg10[%c0_18, %c0_19] : memref<8x4xf32, #tpu.memory_space<vmem>>, vector<8x4xf32>
    %cst_20 = arith.constant dense<0.000000e+00> : vector<8xf32>
    %31 = vector.multi_reduction <add>, %17, %cst_20 [1] : vector<8x256xf32> to vector<8xf32>
    %32 = vector.shape_cast %31 : vector<8xf32> to vector<8x1xf32>
    %33 = arith.mulf %17, %17 : vector<8x256xf32>
    %cst_21 = arith.constant dense<0.000000e+00> : vector<8xf32>
    %34 = vector.multi_reduction <add>, %33, %cst_21 [1] : vector<8x256xf32> to vector<8xf32>
    %35 = vector.shape_cast %34 : vector<8xf32> to vector<8x1xf32>
    %cst_22 = arith.constant dense<0.000000e+00> : vector<8xf32>
    %36 = vector.multi_reduction <add>, %21, %cst_22 [1] : vector<8x256xf32> to vector<8xf32>
    %37 = vector.shape_cast %36 : vector<8xf32> to vector<8x1xf32>
    %38 = arith.mulf %21, %21 : vector<8x256xf32>
    %cst_23 = arith.constant dense<0.000000e+00> : vector<8xf32>
    %39 = vector.multi_reduction <add>, %38, %cst_23 [1] : vector<8x256xf32> to vector<8xf32>
    %40 = vector.shape_cast %39 : vector<8xf32> to vector<8x1xf32>
    %41 = tpu.concatenate %32, %35, %37, %40 in 1 : vector<8x1xf32>, vector<8x1xf32>, vector<8x1xf32>, vector<8x1xf32> -> vector<8x4xf32>
    %42 = arith.addf %30, %41 : vector<8x4xf32>
    %c0_24 = arith.constant 0 : index
    %c0_25 = arith.constant 0 : index
    %43 = vector.load %arg10[%c0_24, %c0_25] : memref<8x4xf32, #tpu.memory_space<vmem>>, vector<8x4xf32>
    tpu.vector_store %arg10[%c0_24, %c0_25], %42 {strides = array<i32>} : memref<8x4xf32, #tpu.memory_space<vmem>>, vector<8x4xf32>,
    %c0_i32_26 = arith.constant 0 : i32
    %44 = arith.cmpi eq, %arg0, %c0_i32_26 : i32
    %45 = arith.extui %44 : i1 to i32
    %c0_i32_27 = arith.constant 0 : i32
    %46 = arith.cmpi ne, %45, %c0_i32_27 : i32
    scf.if %46 {
      %c0_28 = arith.constant 0 : index
      %c0_29 = arith.constant 0 : index
      %47 = vector.load %arg6[%c0_28, %c0_29] : memref<8x4xf32, #tpu.memory_space<vmem>>, vector<8x4xf32>
      %c0_30 = arith.constant 0 : index
      %c0_31 = arith.constant 0 : index
      %48 = vector.load %arg10[%c0_30, %c0_31] : memref<8x4xf32, #tpu.memory_space<vmem>>, vector<8x4xf32>
      %49 = vector.extract_strided_slice %48 {offsets = [0, 0], sizes = [8, 1], strides = [1, 1]} : vector<8x4xf32> to vector<8x1xf32>
      %50 = vector.extract_strided_slice %48 {offsets = [0, 1], sizes = [8, 1], strides = [1, 1]} : vector<8x4xf32> to vector<8x1xf32>
      %51 = vector.extract_strided_slice %47 {offsets = [0, 0], sizes = [8, 1], strides = [1, 1]} : vector<8x4xf32> to vector<8x1xf32>
      %52 = vector.extract_strided_slice %47 {offsets = [0, 1], sizes = [8, 1], strides = [1, 1]} : vector<8x4xf32> to vector<8x1xf32>
      %cst_32 = arith.constant 3.906250e-03 : f32
      %53 = vector.broadcast %cst_32 : f32 to vector<8x1xf32>
      %54 = arith.mulf %49, %53 : vector<8x1xf32>
      %cst_33 = arith.constant 3.906250e-03 : f32
      %55 = vector.broadcast %cst_33 : f32 to vector<8x1xf32>
      %56 = arith.mulf %50, %55 : vector<8x1xf32>
      %57 = arith.mulf %54, %54 : vector<8x1xf32>
      %58 = arith.subf %56, %57 : vector<8x1xf32>
      %cst_34 = arith.constant 9.99999974E-6 : f32
      %59 = vector.broadcast %cst_34 : f32 to vector<8x1xf32>
      %60 = arith.addf %58, %59 : vector<8x1xf32>
      %61 = math.rsqrt %60 : vector<8x1xf32>
      %62 = arith.mulf %51, %61 : vector<8x1xf32>
      %63 = arith.mulf %54, %62 : vector<8x1xf32>
      %64 = arith.subf %52, %63 : vector<8x1xf32>
      %65 = vector.extract_strided_slice %48 {offsets = [0, 2], sizes = [8, 1], strides = [1, 1]} : vector<8x4xf32> to vector<8x1xf32>
      %66 = vector.extract_strided_slice %48 {offsets = [0, 3], sizes = [8, 1], strides = [1, 1]} : vector<8x4xf32> to vector<8x1xf32>
      %67 = vector.extract_strided_slice %47 {offsets = [0, 2], sizes = [8, 1], strides = [1, 1]} : vector<8x4xf32> to vector<8x1xf32>
      %68 = vector.extract_strided_slice %47 {offsets = [0, 3], sizes = [8, 1], strides = [1, 1]} : vector<8x4xf32> to vector<8x1xf32>
      %cst_35 = arith.constant 3.906250e-03 : f32
      %69 = vector.broadcast %cst_35 : f32 to vector<8x1xf32>
      %70 = arith.mulf %65, %69 : vector<8x1xf32>
      %cst_36 = arith.constant 3.906250e-03 : f32
      %71 = vector.broadcast %cst_36 : f32 to vector<8x1xf32>
      %72 = arith.mulf %66, %71 : vector<8x1xf32>
      %73 = arith.mulf %70, %70 : vector<8x1xf32>
      %74 = arith.subf %72, %73 : vector<8x1xf32>
      %cst_37 = arith.constant 9.99999974E-6 : f32
      %75 = vector.broadcast %cst_37 : f32 to vector<8x1xf32>
      %76 = arith.addf %74, %75 : vector<8x1xf32>
      %77 = math.rsqrt %76 : vector<8x1xf32>
      %78 = arith.mulf %67, %77 : vector<8x1xf32>
      %79 = arith.mulf %70, %78 : vector<8x1xf32>
      %80 = arith.subf %68, %79 : vector<8x1xf32>
      %c0_38 = arith.constant 0 : index
      %c0_39 = arith.constant 0 : index
      %c0_40 = arith.constant 0 : index
      %81 = vector.load %arg8[%c0_38, %c0_39, %c0_40] : memref<1x8x256xf32, #tpu.memory_space<vmem>>, vector<1x8x256xf32>
      %82 = vector.shape_cast %62 : vector<8x1xf32> to vector<1x8x1xf32>
      %83 = vector.broadcast %82 : vector<1x8x1xf32> to vector<1x8x256xf32>
      %84 = arith.mulf %81, %83 : vector<1x8x256xf32>
      %85 = vector.shape_cast %64 : vector<8x1xf32> to vector<1x8x1xf32>
      %86 = vector.broadcast %85 : vector<1x8x1xf32> to vector<1x8x256xf32>
      %87 = arith.addf %84, %86 : vector<1x8x256xf32>
      %cst_41 = arith.constant 0.000000e+00 : f32
      %88 = vector.broadcast %cst_41 : f32 to vector<1x8x256xf32>
      %89 = arith.maximumf %87, %88 : vector<1x8x256xf32>
      %c0_42 = arith.constant 0 : index
      %c0_43 = arith.constant 0 : index
      %c0_44 = arith.constant 0 : index
      %90 = vector.load %arg9[%c0_42, %c0_43, %c0_44] : memref<1x8x256xf32, #tpu.memory_space<vmem>>, vector<1x8x256xf32>
      %91 = vector.shape_cast %78 : vector<8x1xf32> to vector<1x8x1xf32>
      %92 = vector.broadcast %91 : vector<1x8x1xf32> to vector<1x8x256xf32>
      %93 = arith.mulf %90, %92 : vector<1x8x256xf32>
      %94 = vector.shape_cast %80 : vector<8x1xf32> to vector<1x8x1xf32>
      %95 = vector.broadcast %94 : vector<1x8x1xf32> to vector<1x8x256xf32>
      %96 = arith.addf %93, %95 : vector<1x8x256xf32>
      %cst_45 = arith.constant 0.000000e+00 : f32
      %97 = vector.broadcast %cst_45 : f32 to vector<1x8x256xf32>
      %98 = arith.maximumf %96, %97 : vector<1x8x256xf32>
      %99 = arith.addf %89, %98 : vector<1x8x256xf32>
      %100 = arith.truncf %99 : vector<1x8x256xf32> to vector<1x8x256xbf16>
      %c0_46 = arith.constant 0 : index
      %c0_47 = arith.constant 0 : index
      %c0_48 = arith.constant 0 : index
      %101 = vector.load %arg7[%c0_46, %c0_47, %c0_48] : memref<1x8x256xbf16, #tpu.memory_space<vmem>>, vector<1x8x256xbf16>
      tpu.vector_store %arg7[%c0_46, %c0_47, %c0_48], %100 {strides = array<i32>} : memref<1x8x256xbf16, #tpu.memory_space<vmem>>, vector<1x8x256xbf16>,
    } else {
    }
    return
  }
  func.func @transform_0(%arg0: i32) -> (i32, i32) {
    %c0_i32 = arith.constant 0 : i32
    %c0_i32_0 = arith.constant 0 : i32
    %c0_i32_1 = arith.constant 0 : i32
    return %c0_i32, %c0_i32_0 : i32, i32
  }
  func.func @transform_1(%arg0: i32) -> (i32, i32, i32) {
    %c0_i32 = arith.constant 0 : i32
    %c0_i32_0 = arith.constant 0 : i32
    %c0_i32_1 = arith.constant 0 : i32
    return %arg0, %c0_i32, %c0_i32_0 : i32, i32, i32
  }
  func.func @transform_2(%arg0: i32) -> (i32, i32, i32) {
    %c0_i32 = arith.constant 0 : i32
    %c0_i32_0 = arith.constant 0 : i32
    %c0_i32_1 = arith.constant 0 : i32
    return %arg0, %c0_i32, %c0_i32_0 : i32, i32, i32
  }
  func.func @transform_3(%arg0: i32) -> (i32, i32) {
    %c0_i32 = arith.constant 0 : i32
    %c0_i32_0 = arith.constant 0 : i32
    %c0_i32_1 = arith.constant 0 : i32
    return %c0_i32, %c0_i32_0 : i32, i32
  }
  func.func @transform_4(%arg0: i32) -> (i32, i32) {
    %c0_i32 = arith.constant 0 : i32
    %c0_i32_0 = arith.constant 0 : i32
    %c0_i32_1 = arith.constant 0 : i32
    return %c0_i32, %c0_i32_0 : i32, i32
  }
  func.func @transform_5(%arg0: i32) -> (i32, i32) {
    %c0_i32 = arith.constant 0 : i32
    %c0_i32_0 = arith.constant 0 : i32
    %c0_i32_1 = arith.constant 0 : i32
    return %c0_i32, %c0_i32_0 : i32, i32
  }
  func.func @transform_6(%arg0: i32) -> (i32, i32, i32) {
    %c0_i32 = arith.constant 0 : i32
    %c0_i32_0 = arith.constant 0 : i32
    %c0_i32_1 = arith.constant 0 : i32
    %c0_i32_2 = arith.constant 0 : i32
    return %c0_i32, %c0_i32_0, %c0_i32_1 : i32, i32, i32
  }
}

</mosaic_0001>

<llo_original>
// kernel: tpu_custom_call.1
$region0: #{tpu_custom_call.1}
  #allocation0 [shape = 'u32[]', space=smem, size = 0x4, offset = 0x4, fixed_abs, tag = 'smem constant byte address 0x4 - core index']
  #allocation1 [shape = 'u32[72,128]{1,0:T(1,128)}', space=vmem, size = 0x9000, scoped, tag = 'internal scratch']
  #allocation2 [shape = 'f32[1,8,256]{2,1,0:T(8,128)}', space=vmem, size = 0x2000, scoped, tag = 'scratch operand']
  #allocation3 [shape = 'f32[1,8,256]{2,1,0:T(8,128)}', space=vmem, size = 0x2000, scoped, tag = 'scratch operand']
  #allocation4 [shape = 'f32[8,4]{1,0:T(8,128)}', space=vmem, size = 0x1000, scoped, tag = 'scratch operand']
  %s0 = inlined_call_operand.vmem [shape: bf16[16,128], index: 0, kind: input, shape index: {}]
  %s1 = inlined_call_operand.hbm [shape: f32[1,16,256], index: 1, kind: input, shape index: {}]
  %s2 = inlined_call_operand.hbm [shape: bf16[1,128,512], index: 2, kind: input, shape index: {}]
  %s3 = inlined_call_operand.hbm [shape: f32[8,32], index: 3, kind: input, shape index: {}]
  %s4 = inlined_call_operand.hbm [shape: f32[8,16], index: 4, kind: input, shape index: {}]
  %s5 = inlined_call_operand.vmem [shape: f32[8,4], index: 5, kind: input, shape index: {}]
  %s6 = inlined_call_operand.hbm [shape: bf16[1,8,256], index: 6, kind: output, shape index: {}]
  %s7 = sld [smem:[#allocation0]]
  $region58: #{tpu_custom_call.1} parent=0
    _
  %s9 = ssub.s32 1, %s7
  %s10 = scalar_select 0, %s9, %s7
  $region1: #{tpu_custom_call.1} parent=0
    #allocation5 [shape = 'u8[16384]{0}', space=vmem, size = 0x4000, scoped, tag = 'input window, operand 1, single buffered']
    #allocation6 [shape = 's32[1]{0}', space=sflag, size = 0x4, scoped, tag = 'scoped memory for tpu_custom_call.1']
    #allocation7 [shape = 's32[1]{0}', space=sflag, size = 0x4, scoped, tag = 'scoped memory for tpu_custom_call.1']
    #allocation8 [shape = 'u8[131072]{0}', space=vmem, size = 0x20000, scoped, tag = 'input window, operand 2, single buffered']
    #allocation9 [shape = 's32[1]{0}', space=sflag, size = 0x4, scoped, tag = 'scoped memory for tpu_custom_call.1']
    #allocation10 [shape = 'u8[4096]{0}', space=vmem, size = 0x1000, scoped, tag = 'input window, operand 3, single buffered']
    #allocation11 [shape = 'u8[4096]{0}', space=vmem, size = 0x1000, scoped, tag = 'input window, operand 4, single buffered']
    #allocation12 [shape = 's32[1]{0}', space=sflag, size = 0x4, scoped, tag = 'scoped memory for tpu_custom_call.1']
    #allocation13 [shape = 'u8[4096]{0}', space=vmem, size = 0x1000, scoped, tag = 'output window, operand 0, single buffered']
    %11 = vsyncpa [#allocation6], 0
    %12 = vsyncpa [#allocation9], 0
    %13 = vsyncpa [#allocation12], 0
    %14 = vsyncpa [#allocation7], 0
    // Predicated region
    $region2: #{tpu_custom_call.1} parent=1 // pred_check
      _
    $region3: #{tpu_custom_call.1} parent=1 // pred_check_branch
      %16 = sbr.rel (0) target = $region5
    $region4: #{tpu_custom_call.1} parent=1 // pred_region
      _
    $region5: #{tpu_custom_call.1} parent=1 // pred_fallthru
      _
    // Predicated region
    $region6: #{tpu_custom_call.1} parent=1 // pred_check
      _
    $region7: #{tpu_custom_call.1} parent=1 // pred_check_branch
      %18 = sbr.rel (0) target = $region9
    $region8: #{tpu_custom_call.1} parent=1 // pred_region
      %20 = vsyncadd [#allocation6], 0
      %s21 = sshll.u32 %s1, 4
      %s22 = int_to_ptr.hbm [resolvable:$true] %s21
      %s23 = sshll.u32 [#allocation5], 4
      %s24 = int_to_ptr.vmem [resolvable:$true] %s23
      %29 = dma.hbm_to_vmem [thread:$0]  %s22, 512, %s24, [#allocation6], 256, 256, 16
    $region9: #{tpu_custom_call.1} parent=1 // pred_fallthru
      _
    // Predicated region
    $region10: #{tpu_custom_call.1} parent=1 // pred_check
      _
    $region11: #{tpu_custom_call.1} parent=1 // pred_check_branch
      %31 = sbr.rel (0) target = $region13
    $region12: #{tpu_custom_call.1} parent=1 // pred_region
      %33 = vsyncadd [#allocation9], 0
      %s34 = sshll.u32 %s2, 4
      %s35 = int_to_ptr.hbm [resolvable:$true] %s34
      %s36 = sshll.u32 [#allocation8], 4
      %s37 = int_to_ptr.vmem [resolvable:$true] %s36
      %42 = dma.hbm_to_vmem [thread:$0]  %s35, 4096, %s37, [#allocation9], 256, 256, 16
    $region13: #{tpu_custom_call.1} parent=1 // pred_fallthru
      _
    // Predicated region
    $region14: #{tpu_custom_call.1} parent=1 // pred_check
      _
    $region15: #{tpu_custom_call.1} parent=1 // pred_check_branch
      %44 = sbr.rel (0) target = $region17
    $region16: #{tpu_custom_call.1} parent=1 // pred_region
      %46 = vsyncadd [#allocation9], 0
      %s48 = sshll.u32 %s3, 4
      %s49 = int_to_ptr.hbm [resolvable:$true] %s48
      %s50 = sshll.u32 [#allocation10], 4
      %s51 = int_to_ptr.vmem [resolvable:$true] %s50
      %53 = dma.hbm_to_vmem [thread:$0]  %s49, 128, %s51, [#allocation9]
    $region17: #{tpu_custom_call.1} parent=1 // pred_fallthru
      _
    // Predicated region
    $region18: #{tpu_custom_call.1} parent=1 // pred_check
      _
    $region19: #{tpu_custom_call.1} parent=1 // pred_check_branch
      %55 = sbr.rel (0) target = $region21
    $region20: #{tpu_custom_call.1} parent=1 // pred_region
      %57 = vsyncadd [#allocation12], 0
      %s59 = sshll.u32 %s4, 4
      %s60 = int_to_ptr.hbm [resolvable:$true] %s59
      %s61 = sshll.u32 [#allocation11], 4
      %s62 = int_to_ptr.vmem [resolvable:$true] %s61
      %64 = dma.hbm_to_vmem [thread:$0]  %s60, 128, %s62, [#allocation12]
    $region21: #{tpu_custom_call.1} parent=1 // pred_fallthru
      _
    // Predicated region
    $region22: #{tpu_custom_call.1} parent=1 // pred_check
      _
    $region23: #{tpu_custom_call.1} parent=1 // pred_check_branch
      %66 = sbr.rel (0) target = $region25
    $region24: #{tpu_custom_call.1} parent=1 // pred_region
      _
    $region25: #{tpu_custom_call.1} parent=1 // pred_fallthru
      _
    // Predicated region
    $region26: #{tpu_custom_call.1} parent=1 // pred_check
      _
    $region27: #{tpu_custom_call.1} parent=1 // pred_check_branch
      %68 = sbr.rel (0) target = $region29
    $region28: #{tpu_custom_call.1} parent=1 // pred_region
      %70 = dma.done [#allocation6], 512
    $region29: #{tpu_custom_call.1} parent=1 // pred_fallthru
      _
    // Predicated region
    $region30: #{tpu_custom_call.1} parent=1 // pred_check
      _
    $region31: #{tpu_custom_call.1} parent=1 // pred_check_branch
      %72 = sbr.rel (0) target = $region33
    $region32: #{tpu_custom_call.1} parent=1 // pred_region
      %74 = dma.done [#allocation9], 4096
    $region33: #{tpu_custom_call.1} parent=1 // pred_fallthru
      _
    // Predicated region
    $region34: #{tpu_custom_call.1} parent=1 // pred_check
      _
    $region35: #{tpu_custom_call.1} parent=1 // pred_check_branch
      %76 = sbr.rel (0) target = $region37
    $region36: #{tpu_custom_call.1} parent=1 // pred_region
      %78 = dma.done [#allocation9], 128
    $region37: #{tpu_custom_call.1} parent=1 // pred_fallthru
      _
    // Predicated region
    $region38: #{tpu_custom_call.1} parent=1 // pred_check
      _
    $region39: #{tpu_custom_call.1} parent=1 // pred_check_branch
      %80 = sbr.rel (0) target = $region41
    $region40: #{tpu_custom_call.1} parent=1 // pred_region
      %82 = dma.done [#allocation12], 128
    $region41: #{tpu_custom_call.1} parent=1 // pred_fallthru
      _
    %p83 = scmp.eq.s32.totalorder 0, 0
    // Predicated region
    $region42: #{tpu_custom_call.1} parent=1 // pred_check
      %p84 = pneg %p83
    $region43: #{tpu_custom_call.1} parent=1 // pred_check_branch
      %86 = sbr.rel (%p84) target = $region45
    $region44: #{tpu_custom_call.1} parent=1 // pred_region
      %vm87 = vcmask 31744
      %88 = vst.msk [vmem:[#allocation4] sm:$0xff] %vm87, 0.0
    $region45: #{tpu_custom_call.1} parent=1 // pred_fallthru
      _
    %v89 = vld [vmem:[%s0] sm:$0xf]
    %v90 = vld [vmem:[%s0 + $0x4] sm:$0xf]
    %v91 = vld [vmem:[#allocation8] sm:$0xff]
    %v92 = vld [vmem:[#allocation8 + $0x8] sm:$0xff]
    %v93 = vld [vmem:[#allocation8 + $0x10] sm:$0xff]
    %v94 = vld [vmem:[#allocation8 + $0x18] sm:$0xff]
    %v95 = vld [vmem:[#allocation8 + $0x20] sm:$0xff]
    %v96 = vld [vmem:[#allocation8 + $0x28] sm:$0xff]
    %v97 = vld [vmem:[#allocation8 + $0x30] sm:$0xff]
    %v98 = vld [vmem:[#allocation8 + $0x38] sm:$0xff]
    %v99 = vld [vmem:[#allocation8 + $0x40] sm:$0xff]
    %v100 = vld [vmem:[#allocation8 + $0x48] sm:$0xff]
    %v101 = vld [vmem:[#allocation8 + $0x50] sm:$0xff]
    %v102 = vld [vmem:[#allocation8 + $0x58] sm:$0xff]
    %v103 = vld [vmem:[#allocation8 + $0x60] sm:$0xff]
    %v104 = vld [vmem:[#allocation8 + $0x68] sm:$0xff]
    %v105 = vld [vmem:[#allocation8 + $0x70] sm:$0xff]
    %v106 = vld [vmem:[#allocation8 + $0x78] sm:$0xff]
    %v107 = vld [vmem:[#allocation8 + $0x80] sm:$0xff]
    %v108 = vld [vmem:[#allocation8 + $0x88] sm:$0xff]
    %v109 = vld [vmem:[#allocation8 + $0x90] sm:$0xff]
    %v110 = vld [vmem:[#allocation8 + $0x98] sm:$0xff]
    %v111 = vld [vmem:[#allocation8 + $0xa0] sm:$0xff]
    %v112 = vld [vmem:[#allocation8 + $0xa8] sm:$0xff]
    %v113 = vld [vmem:[#allocation8 + $0xb0] sm:$0xff]
    %v114 = vld [vmem:[#allocation8 + $0xb8] sm:$0xff]
    %v115 = vld [vmem:[#allocation8 + $0xc0] sm:$0xff]
    %v116 = vld [vmem:[#allocation8 + $0xc8] sm:$0xff]
    %v117 = vld [vmem:[#allocation8 + $0xd0] sm:$0xff]
    %v118 = vld [vmem:[#allocation8 + $0xd8] sm:$0xff]
    %v119 = vld [vmem:[#allocation8 + $0xe0] sm:$0xff]
    %v120 = vld [vmem:[#allocation8 + $0xe8] sm:$0xff]
    %v121 = vld [vmem:[#allocation8 + $0xf0] sm:$0xff]
    %v122 = vld [vmem:[#allocation8 + $0xf8] sm:$0xff]
    %v125 = vunpack.c.l.b16 %v89
    %v126 = vunpack.c.l.b16 %v90
    %v127 = vpack.c.b16 %v126, %v125
    %v161 = vunpack.c.l.b16 %v91
    %v162 = vunpack.c.h.b16 %v91
    %v163 = vunpack.c.l.b16 %v92
    %v164 = vunpack.c.h.b16 %v92
    %v165 = vunpack.c.l.b16 %v93
    %v166 = vunpack.c.h.b16 %v93
    %v167 = vunpack.c.l.b16 %v94
    %v168 = vunpack.c.h.b16 %v94
    %v169 = vunpack.c.l.b16 %v95
    %v170 = vunpack.c.h.b16 %v95
    %v171 = vunpack.c.l.b16 %v96
    %v172 = vunpack.c.h.b16 %v96
    %v173 = vunpack.c.l.b16 %v97
    %v174 = vunpack.c.h.b16 %v97
    %v175 = vunpack.c.l.b16 %v98
    %v176 = vunpack.c.h.b16 %v98
    %v177 = vunpack.c.l.b16 %v99
    %v178 = vunpack.c.h.b16 %v99
    %v179 = vunpack.c.l.b16 %v100
    %v180 = vunpack.c.h.b16 %v100
    %v181 = vunpack.c.l.b16 %v101
    %v182 = vunpack.c.h.b16 %v101
    %v183 = vunpack.c.l.b16 %v102
    %v184 = vunpack.c.h.b16 %v102
    %v185 = vunpack.c.l.b16 %v103
    %v186 = vunpack.c.h.b16 %v103
    %v187 = vunpack.c.l.b16 %v104
    %v188 = vunpack.c.h.b16 %v104
    %v189 = vunpack.c.l.b16 %v105
    %v190 = vunpack.c.h.b16 %v105
    %v191 = vunpack.c.l.b16 %v106
    %v192 = vunpack.c.h.b16 %v106
    %v193 = vunpack.c.l.b16 %v107
    %v194 = vunpack.c.h.b16 %v107
    %v195 = vunpack.c.l.b16 %v108
    %v196 = vunpack.c.h.b16 %v108
    %v197 = vunpack.c.l.b16 %v109
    %v198 = vunpack.c.h.b16 %v109
    %v199 = vunpack.c.l.b16 %v110
    %v200 = vunpack.c.h.b16 %v110
    %v201 = vunpack.c.l.b16 %v111
    %v202 = vunpack.c.h.b16 %v111
    %v203 = vunpack.c.l.b16 %v112
    %v204 = vunpack.c.h.b16 %v112
    %v205 = vunpack.c.l.b16 %v113
    %v206 = vunpack.c.h.b16 %v113
    %v207 = vunpack.c.l.b16 %v114
    %v208 = vunpack.c.h.b16 %v114
    %v209 = vunpack.c.l.b16 %v115
    %v210 = vunpack.c.h.b16 %v115
    %v211 = vunpack.c.l.b16 %v116
    %v212 = vunpack.c.h.b16 %v116
    %v213 = vunpack.c.l.b16 %v117
    %v214 = vunpack.c.h.b16 %v117
    %v215 = vunpack.c.l.b16 %v118
    %v216 = vunpack.c.h.b16 %v118
    %v217 = vunpack.c.l.b16 %v119
    %v218 = vunpack.c.h.b16 %v119
    %v219 = vunpack.c.l.b16 %v120
    %v220 = vunpack.c.h.b16 %v120
    %v221 = vunpack.c.l.b16 %v121
    %v222 = vunpack.c.h.b16 %v121
    %v223 = vunpack.c.l.b16 %v122
    %v224 = vunpack.c.h.b16 %v122
    %v225 = vpack.c.b16 %v165, %v161
    %v226 = vpack.c.b16 %v166, %v162
    %v227 = vpack.c.b16 %v167, %v163
    %v228 = vpack.c.b16 %v168, %v164
    %v229 = vpack.c.b16 %v173, %v169
    %v230 = vpack.c.b16 %v174, %v170
    %v231 = vpack.c.b16 %v175, %v171
    %v232 = vpack.c.b16 %v176, %v172
    %v233 = vpack.c.b16 %v181, %v177
    %v234 = vpack.c.b16 %v182, %v178
    %v235 = vpack.c.b16 %v183, %v179
    %v236 = vpack.c.b16 %v184, %v180
    %v237 = vpack.c.b16 %v189, %v185
    %v238 = vpack.c.b16 %v190, %v186
    %v239 = vpack.c.b16 %v191, %v187
    %v240 = vpack.c.b16 %v192, %v188
    %v241 = vpack.c.b16 %v197, %v193
    %v242 = vpack.c.b16 %v198, %v194
    %v243 = vpack.c.b16 %v199, %v195
    %v244 = vpack.c.b16 %v200, %v196
    %v245 = vpack.c.b16 %v205, %v201
    %v246 = vpack.c.b16 %v206, %v202
    %v247 = vpack.c.b16 %v207, %v203
    %v248 = vpack.c.b16 %v208, %v204
    %v249 = vpack.c.b16 %v213, %v209
    %v250 = vpack.c.b16 %v214, %v210
    %v251 = vpack.c.b16 %v215, %v211
    %v252 = vpack.c.b16 %v216, %v212
    %v253 = vpack.c.b16 %v221, %v217
    %v254 = vpack.c.b16 %v222, %v218
    %v255 = vpack.c.b16 %v223, %v219
    %v256 = vpack.c.b16 %v224, %v220
    %289 = vmatpush.bf16.msra.mxu0 %v253
    %290 = vmatpush.bf16.msra.mxu0 %v249
    %291 = vmatpush.bf16.msra.mxu0 %v245
    %292 = vmatpush.bf16.msra.mxu0 %v241
    %293 = vmatpush.bf16.msra.mxu0 %v237
    %294 = vmatpush.bf16.msra.mxu0 %v233
    %295 = vmatpush.bf16.msra.mxu0 %v229
    %296 = vmatpush.bf16.msra.mxu0 %v225
    %297 = vmatmul.bf16.gmra.mxu0 %v127
    %v298 = vpop.f32.mrf.mxu0
    %v299 = vadd.f32 0.0, %v298
    %v300 = vpop.f32.mrf.mxu0
    %v301 = vadd.f32 0.0, %v300
    %302 = vdwg.mxu0
    %303 = vmatpush.bf16.msra.mxu0 %v254
    %304 = vmatpush.bf16.msra.mxu0 %v250
    %305 = vmatpush.bf16.msra.mxu0 %v246
    %306 = vmatpush.bf16.msra.mxu0 %v242
    %307 = vmatpush.bf16.msra.mxu0 %v238
    %308 = vmatpush.bf16.msra.mxu0 %v234
    %309 = vmatpush.bf16.msra.mxu0 %v230
    %310 = vmatpush.bf16.msra.mxu0 %v226
    %311 = vmatmul.bf16.gmra.mxu0 %v127
    %v312 = vpop.f32.mrf.mxu0
    %v313 = vadd.f32 0.0, %v312
    %v314 = vpop.f32.mrf.mxu0
    %v315 = vadd.f32 0.0, %v314
    %316 = vdwg.mxu0
    %317 = vmatpush.bf16.msra.mxu0 %v255
    %318 = vmatpush.bf16.msra.mxu0 %v251
    %319 = vmatpush.bf16.msra.mxu0 %v247
    %320 = vmatpush.bf16.msra.mxu0 %v243
    %321 = vmatpush.bf16.msra.mxu0 %v239
    %322 = vmatpush.bf16.msra.mxu0 %v235
    %323 = vmatpush.bf16.msra.mxu0 %v231
    %324 = vmatpush.bf16.msra.mxu0 %v227
    %325 = vmatmul.bf16.gmra.mxu0 %v127
    %v326 = vpop.f32.mrf.mxu0
    %v327 = vadd.f32 0.0, %v326
    %v328 = vpop.f32.mrf.mxu0
    %v329 = vadd.f32 0.0, %v328
    %330 = vdwg.mxu0
    %331 = vmatpush.bf16.msra.mxu0 %v256
    %332 = vmatpush.bf16.msra.mxu0 %v252
    %333 = vmatpush.bf16.msra.mxu0 %v248
    %334 = vmatpush.bf16.msra.mxu0 %v244
    %335 = vmatpush.bf16.msra.mxu0 %v240
    %336 = vmatpush.bf16.msra.mxu0 %v236
    %337 = vmatpush.bf16.msra.mxu0 %v232
    %338 = vmatpush.bf16.msra.mxu0 %v228
    %339 = vmatmul.bf16.gmra.mxu0 %v127
    %v340 = vpop.f32.mrf.mxu0
    %v341 = vadd.f32 0.0, %v340
    %v342 = vpop.f32.mrf.mxu0
    %v343 = vadd.f32 0.0, %v342
    %344 = vdwg.mxu0
    %v345 = vld [vmem:[#allocation10] sm:$0xff]
    %v347 = vunpack.c.l.s4 1966171168
    %v348 = vunpack.c.0.s8 %v347
    %v349 = vperm.slane %v299, %v348
    %v351 = vunpack.c.l.s4 1966171168
    %v352 = vunpack.c.0.s8 %v351
    %v353 = vperm.slane %v301, %v352
    %v355 = vunpack.c.l.s4 1966171168
    %v356 = vunpack.c.0.s8 %v355
    %v357 = vperm.slane %v313, %v356
    %v359 = vunpack.c.l.s4 1966171168
    %v360 = vunpack.c.0.s8 %v359
    %v361 = vperm.slane %v315, %v360
    %v363 = vunpack.c.l.s4 1966171168
    %v364 = vunpack.c.0.s8 %v363
    %v365 = vperm.slane %v327, %v364
    %v367 = vunpack.c.l.s4 1966171168
    %v368 = vunpack.c.0.s8 %v367
    %v369 = vperm.slane %v329, %v368
    %v371 = vunpack.c.l.s4 1966171168
    %v372 = vunpack.c.0.s8 %v371
    %v373 = vperm.slane %v341, %v372
    %v375 = vunpack.c.l.s4 1966171168
    %v376 = vunpack.c.0.s8 %v375
    %v377 = vperm.slane %v343, %v376
    %380 = vst [vmem:[#allocation1] ss:$2 sm:$0xff] %v349
    %s381 = scalar_lea.vmem [#allocation1], 1
    %382 = vst [vmem:[%s381] ss:$2 sm:$0xff] %v353
    %v383 = vld.sshfl [vmem:[#allocation1] sm:$0xff pattern:$0x75316420]
    %v384 = vld.sshfl [vmem:[#allocation1 + $0x8] sm:$0xff pattern:$0x75316420]
    %389 = vst [vmem:[#allocation1] ss:$2 sm:$0xff] %v357
    %s390 = scalar_lea.vmem [#allocation1], 1
    %391 = vst [vmem:[%s390] ss:$2 sm:$0xff] %v361
    %v392 = vld.sshfl [vmem:[#allocation1] sm:$0xff pattern:$0x75316420]
    %v393 = vld.sshfl [vmem:[#allocation1 + $0x8] sm:$0xff pattern:$0x75316420]
    %398 = vst [vmem:[#allocation1] ss:$2 sm:$0xff] %v365
    %s399 = scalar_lea.vmem [#allocation1], 1
    %400 = vst [vmem:[%s399] ss:$2 sm:$0xff] %v369
    %v401 = vld.sshfl [vmem:[#allocation1] sm:$0xff pattern:$0x75316420]
    %v402 = vld.sshfl [vmem:[#allocation1 + $0x8] sm:$0xff pattern:$0x75316420]
    %407 = vst [vmem:[#allocation1] ss:$2 sm:$0xff] %v373
    %s408 = scalar_lea.vmem [#allocation1], 1
    %409 = vst [vmem:[%s408] ss:$2 sm:$0xff] %v377
    %v410 = vld.sshfl [vmem:[#allocation1] sm:$0xff pattern:$0x75316420]
    %v411 = vld.sshfl [vmem:[#allocation1 + $0x8] sm:$0xff pattern:$0x75316420]
    %vm414 = vcmask 261120
    %v416 = vsel %vm414, %v345, 0
    %418 = vmatpush.msra.mxu0 0.0
    %419 = vmatpush.msra.mxu0 0.0
    %420 = vmatpush.msra.mxu0 0.0
    %421 = vmatpush.msra.mxu0 0.0
    %422 = vmatpush.msra.mxu0 0.0
    %423 = vmatpush.msra.mxu0 0.0
    %424 = vmatpush.msra.mxu0 0.0
    %425 = vmatpush.msra.mxu0 0.0
    %426 = vmatpush.msra.mxu0 0.0
    %427 = vmatpush.msra.mxu0 0.0
    %428 = vmatpush.msra.mxu0 0.0
    %429 = vmatpush.msra.mxu0 0.0
    %430 = vmatpush.msra.mxu0 %v410
    %431 = vmatpush.msra.mxu0 %v401
    %432 = vmatpush.msra.mxu0 %v392
    %433 = vmatpush.msra.mxu0 %v383
    %434 = vmatmul.f32.gmra.mxu0 %v416
    %v435 = vpop.f32.mrf.mxu0
    %v436 = vadd.f32 0.0, %v435
    %437 = vdwg.mxu0
    %438 = vmatpush.msra.mxu0 0.0
    %439 = vmatpush.msra.mxu0 0.0
    %440 = vmatpush.msra.mxu0 0.0
    %441 = vmatpush.msra.mxu0 0.0
    %442 = vmatpush.msra.mxu0 0.0
    %443 = vmatpush.msra.mxu0 0.0
    %444 = vmatpush.msra.mxu0 0.0
    %445 = vmatpush.msra.mxu0 0.0
    %446 = vmatpush.msra.mxu0 0.0
    %447 = vmatpush.msra.mxu0 0.0
    %448 = vmatpush.msra.mxu0 0.0
    %449 = vmatpush.msra.mxu0 0.0
    %450 = vmatpush.msra.mxu0 %v411
    %451 = vmatpush.msra.mxu0 %v402
    %452 = vmatpush.msra.mxu0 %v393
    %453 = vmatpush.msra.mxu0 %v384
    %454 = vmatmul.f32.gmra.mxu0 %v416
    %v455 = vpop.f32.mrf.mxu0
    %v456 = vadd.f32 0.0, %v455
    %457 = vdwg.mxu0
    %v458 = vld [vmem:[#allocation11] sm:$0xff]
    %v459 = vld [vmem:[#allocation5] sm:$0xff]
    %v460 = vld [vmem:[#allocation5 + $0x8] sm:$0xff]
    %v461 = vld [vmem:[#allocation5 + $0x10] sm:$0xff]
    %v462 = vld [vmem:[#allocation5 + $0x18] sm:$0xff]
    %vm463 = vcmask 130048
    %v465 = vsel %vm463, %v458, 0
    %467 = vmatpush.msra.mxu0 0.0
    %468 = vmatpush.msra.mxu0 0.0
    %469 = vmatpush.msra.mxu0 0.0
    %470 = vmatpush.msra.mxu0 0.0
    %471 = vmatpush.msra.mxu0 0.0
    %472 = vmatpush.msra.mxu0 0.0
    %473 = vmatpush.msra.mxu0 0.0
    %474 = vmatpush.msra.mxu0 0.0
    %475 = vmatpush.msra.mxu0 0.0
    %476 = vmatpush.msra.mxu0 0.0
    %477 = vmatpush.msra.mxu0 0.0
    %478 = vmatpush.msra.mxu0 0.0
    %479 = vmatpush.msra.mxu0 0.0
    %480 = vmatpush.msra.mxu0 0.0
    %481 = vmatpush.msra.mxu0 %v461
    %482 = vmatpush.msra.mxu0 %v459
    %483 = vmatmul.f32.gmra.mxu0 %v465
    %v484 = vpop.f32.mrf.mxu0
    %v485 = vadd.f32 0.0, %v484
    %486 = vdwg.mxu0
    %487 = vmatpush.msra.mxu0 0.0
    %488 = vmatpush.msra.mxu0 0.0
    %489 = vmatpush.msra.mxu0 0.0
    %490 = vmatpush.msra.mxu0 0.0
    %491 = vmatpush.msra.mxu0 0.0
    %492 = vmatpush.msra.mxu0 0.0
    %493 = vmatpush.msra.mxu0 0.0
    %494 = vmatpush.msra.mxu0 0.0
    %495 = vmatpush.msra.mxu0 0.0
    %496 = vmatpush.msra.mxu0 0.0
    %497 = vmatpush.msra.mxu0 0.0
    %498 = vmatpush.msra.mxu0 0.0
    %499 = vmatpush.msra.mxu0 0.0
    %500 = vmatpush.msra.mxu0 0.0
    %501 = vmatpush.msra.mxu0 %v462
    %502 = vmatpush.msra.mxu0 %v460
    %503 = vmatmul.f32.gmra.mxu0 %v465
    %v504 = vpop.f32.mrf.mxu0
    %v505 = vadd.f32 0.0, %v504
    %506 = vdwg.mxu0
    %s507 = smul.u32 0, 2
    %s508 = smul.addr %s507, 8
    %s509 = scalar_lea.vmem [#allocation2], %s508
    %510 = vst [vmem:[%s509] sm:$0xff] %v436
    %511 = vst [vmem:[%s509 + $0x8] sm:$0xff] %v456
    %s512 = smul.addr %s507, 8
    %s513 = scalar_lea.vmem [#allocation3], %s512
    %514 = vst [vmem:[%s513] sm:$0xff] %v485
    %515 = vst [vmem:[%s513 + $0x8] sm:$0xff] %v505
    %v516 = vld [vmem:[#allocation4] sm:$0xff]
    %v517 = vadd.f32 %v436, %v456
    %518 = vadd.xlane.f32.xlu0 %v517
    %v519 = vpop.xlane.xlu0 %518
    %v520 = vmul.f32 %v436, %v436
    %v521 = vmul.f32 %v456, %v456
    %v522 = vadd.f32 %v520, %v521
    %523 = vadd.xlane.f32.xlu0 %v522
    %v524 = vpop.xlane.xlu0 %523
    %v525 = vadd.f32 %v485, %v505
    %526 = vadd.xlane.f32.xlu0 %v525
    %v527 = vpop.xlane.xlu0 %526
    %v528 = vmul.f32 %v485, %v485
    %v529 = vmul.f32 %v505, %v505
    %v530 = vadd.f32 %v528, %v529
    %531 = vadd.xlane.f32.xlu0 %v530
    %v532 = vpop.xlane.xlu0 %531
    %vm533 = vcmask 7168
    %v534 = vsel %vm533, %v519, %v524
    %vm535 = vcmask 15360
    %v536 = vsel %vm535, %v534, %v527
    %vm537 = vcmask 23552
    %v538 = vsel %vm537, %v536, %v532
    %v539 = vadd.f32 %v516, %v538
    %vm540 = vcmask 31744
    %541 = vst.msk [vmem:[#allocation4] sm:$0xff] %vm540, %v539
    // Predicated region
    $region46: #{tpu_custom_call.1} parent=1 // pred_check
      %p542 = pneg %p83
    $region47: #{tpu_custom_call.1} parent=1 // pred_check_branch
      %544 = sbr.rel (%p542) target = $region49
    $region48: #{tpu_custom_call.1} parent=1 // pred_region
      %v545 = vld [vmem:[%s5] sm:$0xff]
      %v546 = vld [vmem:[#allocation4] sm:$0xff]
      %v547 = vmul.f32 %v546, 0.00390625
      %v548 = vmul.f32 %v547, %v547
      %550 = vrot.lane.b32.xlu0 %v548, 1
      %v551 = vpop.permute.xlu0 %550
      %v553 = vsub.f32 %v547, %v551
      %v554 = vadd.f32 %v553, 1e-05
      %v555 = vrsqrt.pop %v554
      %v556 = vmul.f32 %v555, %v554
      %v557 = vmul.f32 %v556, %v555
      %v558 = vmul.f32 0.5, %v557
      %v559 = vsub.f32 1.5, %v558
      %v560 = vmul.f32 %v555, %v559
      %vm561 = vweird.f32 %v554
      %vm562 = vweird.f32 %v555
      %vm563 = vmor %vm561, %vm562
      %v564 = vsel %vm563, %v555, %v560
      %566 = vrot.lane.b32.xlu0 %v564, 127
      %v567 = vpop.permute.xlu0 %566
      %v569 = vmul.f32 %v545, %v567
      %v570 = vmul.f32 %v547, %v569
      %572 = vrot.lane.b32.xlu0 %v570, 1
      %v573 = vpop.permute.xlu0 %572
      %v575 = vsub.f32 %v545, %v573
      %v576 = vld [vmem:[#allocation2] sm:$0xff]
      %v577 = vld [vmem:[#allocation2 + $0x8] sm:$0xff]
      %579 = vset.pattern.permute.xlu0 0
      %580 = vperm.xlu0 %579, %v569
      %v581 = vpop.permute.xlu0 %580
      %v583 = vmul.f32 %v576, %v581
      %v584 = vmul.f32 %v577, %v581
      %586 = vset.pattern.permute.xlu0 1
      %587 = vperm.xlu0 %586, %v575
      %v588 = vpop.permute.xlu0 %587
      %v590 = vadd.f32 %v583, %v588
      %v591 = vadd.f32 %v584, %v588
      %v592 = vmax.f32 %v590, 0.0
      %v593 = vmax.f32 %v591, 0.0
      %v594 = vld [vmem:[#allocation3] sm:$0xff]
      %v595 = vld [vmem:[#allocation3 + $0x8] sm:$0xff]
      %596 = vset.pattern.permute.xlu0 2
      %597 = vperm.xlu0 %596, %v569
      %v598 = vpop.permute.xlu0 %597
      %v600 = vmul.f32 %v594, %v598
      %v601 = vmul.f32 %v595, %v598
      %602 = vset.pattern.permute.xlu0 3
      %603 = vperm.xlu0 %602, %v575
      %v604 = vpop.permute.xlu0 %603
      %v606 = vadd.f32 %v600, %v604
      %v607 = vadd.f32 %v601, %v604
      %v608 = vmax.f32 %v606, 0.0
      %v609 = vmax.f32 %v607, 0.0
      %v610 = vadd.f32 %v592, %v608
      %v611 = vadd.f32 %v593, %v609
      %v612 = vpack.c.bf16 %v611, %v610
      %613 = vst [vmem:[#allocation13] sm:$0xff] %v612
    $region49: #{tpu_custom_call.1} parent=1 // pred_fallthru
      _
    // Predicated region
    $region50: #{tpu_custom_call.1} parent=1 // pred_check
      _
    $region51: #{tpu_custom_call.1} parent=1 // pred_check_branch
      %615 = sbr.rel (0) target = $region53
    $region52: #{tpu_custom_call.1} parent=1 // pred_region
      %617 = vsyncadd [#allocation7], 0
      %s619 = sshll.u32 [#allocation13], 4
      %s620 = int_to_ptr.vmem [resolvable:$true] %s619
      %s621 = sshll.u32 %s6, 4
      %s622 = int_to_ptr.hbm [resolvable:$true] %s621
      %624 = dma.vmem_to_hbm [thread:$0]  %s620, 128, %s622, [#allocation7]
    $region53: #{tpu_custom_call.1} parent=1 // pred_fallthru
      _
    // Predicated region
    $region54: #{tpu_custom_call.1} parent=1 // pred_check
      _
    $region55: #{tpu_custom_call.1} parent=1 // pred_check_branch
      %626 = sbr.rel (0) target = $region57
    $region56: #{tpu_custom_call.1} parent=1 // pred_region
      %628 = dma.done [#allocation7], 128
    $region57: #{tpu_custom_call.1} parent=1 // pred_fallthru
      _
    %629 = vsyncpa [#allocation6], 1
    %630 = vsyncpa [#allocation9], 1
    %631 = vsyncpa [#allocation12], 1
    %632 = vsyncpa [#allocation7], 1

</llo_original>
